<compile_context>
chip_gen: v6e
topology: v6e:2x2x1
jax: 0.10.0
libtpu: 0.0.40
codegen_flags: <defaults>
</compile_context>

<pallas_src>
import jax
import jax.numpy as jnp
from jax.experimental import pallas as pl
from jax.experimental.pallas import tpu as pltpu


# ---------------------------------------------------------------------------
# Interpolation weights (host side, match PyTorch align_corners=False, scale 2)
# ---------------------------------------------------------------------------
def _bilinear_interp_matrix(n_in: int, dtype) -> jnp.ndarray:
    """1-D bilinear (align_corners=False) interpolation matrix for scale factor 2."""
    n_out = 2 * n_in
    dst = jnp.arange(n_out, dtype=jnp.float32)
    src = (dst + 0.5) * 0.5 - 0.5            # half-pixel source coordinate
    src = jnp.clip(src, 0.0, None)           # PyTorch clamps negative src to 0
    i0 = jnp.clip(jnp.floor(src).astype(jnp.int32), 0, n_in - 1)
    i1 = jnp.minimum(i0 + 1, n_in - 1)
    frac = src - i0.astype(jnp.float32)
    rows = jnp.arange(n_out)
    w = jnp.zeros((n_out, n_in), dtype=jnp.float32)
    w = w.at[rows, i0].add(1.0 - frac)
    w = w.at[rows, i1].add(frac)
    return w.astype(dtype)


# ---------------------------------------------------------------------------
# Kernel: width pass (one big dot) -> height pass (per plane, direct store)
# ---------------------------------------------------------------------------
def _upsample_kernel(wh_ref, wwt_ref, x_ref, o_ref):
    # wh_ref: (2H, H)   wwt_ref: (W, 2W)   x_ref: (B, H, W)   o_ref: (B, 2H, 2W)
    wh = wh_ref[...]
    wwt = wwt_ref[...]
    b_planes, h, _ = x_ref.shape

    # Width pass: single MXU call on the flattened plane batch, f32 accumulation.
    x_flat = x_ref[...].reshape(b_planes * h, x_ref.shape[2])
    t = jnp.dot(x_flat, wwt, preferred_element_type=jnp.float32)     # (B*H, 2W) f32
    t = t.astype(wh.dtype)

    # Height pass: per plane, write straight into the output block (no concat / re-slice).
    for b in range(b_planes):
        o_ref[b] = jnp.dot(
            wh, t[b * h:(b + 1) * h], preferred_element_type=jnp.float32
        ).astype(o_ref.dtype)


# ---------------------------------------------------------------------------
# Sizing heuristics (generation-aware, padding-aware)
# ---------------------------------------------------------------------------
_MIN_STEPS = 8                 # >= 4 pipelined steps per TensorCore on v7x (2 TCs)
_TARGET_STEP_TRAFFIC = 4 << 20  # aim for ~2-8 MB of in+out block traffic per step
_MAX_PLANE_UNROLL = 64          # bound the per-step height-pass unroll (compile-time sanity)


def _round_up(v: int, m: int) -> int:
    return ((v + m - 1) // m) * m


def _vmem_capacity_bytes() -> int:
    """Per-TensorCore VMEM capacity; conservative fallback = 64 MiB (v7x)."""
    try:
        cap = int(getattr(pltpu.get_tpu_info(), "vmem_capacity_bytes", 0))
        if cap > 0:
            return cap
    except Exception:
        pass
    return 64 * 1024 * 1024


def _per_step_bytes(b: int, h: int, w: int, x_itemsize: int, w_itemsize: int) -> int:
    """Padding-aware VMEM footprint of one grid step (double-buffered blocks + temporaries)."""
    x_sub = 16 if x_itemsize == 2 else 8
    w_sub = 16 if w_itemsize == 2 else 8
    in_blk = b * _round_up(h, x_sub) * _round_up(w, 128) * x_itemsize
    out_blk = b * _round_up(2 * h, x_sub) * _round_up(2 * w, 128) * x_itemsize
    wh_blk = _round_up(2 * h, w_sub) * _round_up(h, 128) * w_itemsize
    wwt_blk = _round_up(w, w_sub) * _round_up(2 * w, 128) * w_itemsize
    # f32 temporaries kept live in the kernel: t = (B*H, 2W) plus one (2H, 2W) dot result.
    tmp = (b * _round_up(h, 8) * _round_up(2 * w, 128)
           + _round_up(2 * h, 8) * _round_up(2 * w, 128)) * 4
    # Input/output AND the constant weight blocks are (conservatively) double-buffered.
    return 2 * (in_blk + out_blk + wh_blk + wwt_blk) + tmp


def _choose_plane_batch(nc, h, w, x_itemsize, w_itemsize, vmem_step_budget):
    """Plane batch B targeting ~2-8 MB of block traffic/step, >= _MIN_STEPS grid steps,
    and a padding-aware per-step footprint within the VMEM budget."""
    per_plane_traffic = 5 * h * w * x_itemsize            # 1x in + 4x out bytes per plane
    b_steps = max(1, nc // _MIN_STEPS)                     # keep the pipeline >= 8 steps deep
    b_traffic = max(1, _TARGET_STEP_TRAFFIC // per_plane_traffic)
    b = max(1, min(nc, b_steps, b_traffic, _MAX_PLANE_UNROLL))
    while b > 1 and _per_step_bytes(b, h, w, x_itemsize, w_itemsize) > vmem_step_budget:
        b -= 1
    # Prefer a nearby divisor of nc (<= 25% smaller) so no padding copy is needed.
    for cand in range(b, max(1, (3 * b) // 4) - 1, -1):
        if nc % cand == 0:
            return cand
    return b


# ---------------------------------------------------------------------------
# Wrapper
# ---------------------------------------------------------------------------
def upsample_block(x: jnp.ndarray) -> jnp.ndarray:
    """Bilinear 2x upsampling of an NCHW tensor (matches nn.Upsample(scale_factor=2,
    mode='bilinear') with default align_corners=False)."""
    n, c, h, w = x.shape
    nc = n * c

    w_dtype = jnp.bfloat16 if x.dtype == jnp.bfloat16 else jnp.float32
    wh = _bilinear_interp_matrix(h, w_dtype)          # (2H, H)
    wwt = _bilinear_interp_matrix(w, w_dtype).T       # (W, 2W)

    x_itemsize = jnp.dtype(x.dtype).itemsize
    w_itemsize = jnp.dtype(w_dtype).itemsize

    cap = _vmem_capacity_bytes()
    step_budget = cap // 3                            # ~21 MiB on v7x, ~42 MiB on v5e/v6e
    bsz = _choose_plane_batch(nc, h, w, x_itemsize, w_itemsize, step_budget)
    steps = pl.cdiv(nc, bsz)
    nc_pad = steps * bsz

    per_step = _per_step_bytes(bsz, h, w, x_itemsize, w_itemsize)
    vmem_limit = int(min(max(per_step + (8 << 20), 32 << 20), (cap * 82) // 100))
    # TODO(synk): add an H-tiling grid axis (per-row-tile slices of W_h) for planes whose
    # padded footprint exceeds a single VMEM step, and a lane-packed layout for W < 64.

    xf = x.reshape(nc, h, w)
    if nc_pad != nc:
        xf = jnp.pad(xf, ((0, nc_pad - nc), (0, 0), (0, 0)))

    out = pl.pallas_call(
        _upsample_kernel,
        out_shape=jax.ShapeDtypeStruct((nc_pad, 2 * h, 2 * w), x.dtype),
        grid_spec=pltpu.PrefetchScalarGridSpec(
            num_scalar_prefetch=0,
            grid=(steps,),
            in_specs=[
                pl.BlockSpec((2 * h, h), lambda i: (0, 0)),       # W_h: constant -> resident
                pl.BlockSpec((w, 2 * w), lambda i: (0, 0)),       # W_w^T: constant -> resident
                pl.BlockSpec((bsz, h, w), lambda i: (i, 0, 0)),   # B input planes per step
            ],
            out_specs=pl.BlockSpec((bsz, 2 * h, 2 * w), lambda i: (i, 0, 0)),
        ),
        compiler_params=pltpu.CompilerParams(
            dimension_semantics=("parallel",),
            vmem_limit_bytes=vmem_limit,
        ),
    )(wh, wwt, xf)

    if nc_pad != nc:
        out = out[:nc]
    return out.reshape(n, c, 2 * h, 2 * w)


# ---------------------------------------------------------------------------
# Pure-JAX reference + self-test
# ---------------------------------------------------------------------------
def _reference(x: jnp.ndarray) -> jnp.ndarray:
    n, c, h, w = x.shape
    wh = _bilinear_interp_matrix(h, jnp.float32)
    ww = _bilinear_interp_matrix(w, jnp.float32)
    return jnp.einsum("oh,nchw,pw->ncop", wh, x.astype(jnp.float32), ww).astype(x.dtype)


if __name__ == "__main__":
    key = jax.random.PRNGKey(0)
    x = jax.random.normal(key, (2, 4, 16, 16), dtype=jnp.float32)   # NCHW

    y = jax.block_until_ready(upsample_block(x))

    assert y.shape == (2, 4, 32, 32), y.shape
    y_ref = _reference(x)
    assert jnp.allclose(y, y_ref, atol=1e-5, rtol=1e-5), "mismatch vs reference"

    print("KERNEL_OK")
</pallas_src>

<mosaic_0001>
module attributes {stable_mosaic.version = 11 : i64} {
  func.func @_upsample_kernel(%arg0: i32, %arg1: memref<32x16xf32, #tpu.memory_space<vmem>>, %arg2: memref<16x32xf32, #tpu.memory_space<vmem>>, %arg3: memref<1x16x16xf32, #tpu.memory_space<vmem>>, %arg4: memref<1x32x32xf32, #tpu.memory_space<vmem>>) attributes {dimension_semantics = [#tpu.dimension_semantics<parallel>], iteration_bounds = array<i64: 8>, scalar_prefetch = 0 : i64, scratch_operands = 0 : i64, tpu.core_type = #tpu.core_type<tc>, window_params = [{pipeline_mode = #tpu.pipeline_mode<synchronous>, transform_indices = @transform_0, window_bounds = array<i64: 32, 16>}, {pipeline_mode = #tpu.pipeline_mode<synchronous>, transform_indices = @transform_1, window_bounds = array<i64: 16, 32>}, {transform_indices = @transform_2, window_bounds = array<i64: 1, 16, 16>}, {transform_indices = @transform_3, window_bounds = array<i64: 1, 32, 32>}]} {
    %c0 = arith.constant 0 : index
    %c0_0 = arith.constant 0 : index
    %0 = vector.load %arg1[%c0, %c0_0] : memref<32x16xf32, #tpu.memory_space<vmem>>, vector<32x16xf32>
    %c0_1 = arith.constant 0 : index
    %c0_2 = arith.constant 0 : index
    %1 = vector.load %arg2[%c0_1, %c0_2] : memref<16x32xf32, #tpu.memory_space<vmem>>, vector<16x32xf32>
    %c0_3 = arith.constant 0 : index
    %c0_4 = arith.constant 0 : index
    %c0_5 = arith.constant 0 : index
    %2 = vector.load %arg3[%c0_3, %c0_4, %c0_5] : memref<1x16x16xf32, #tpu.memory_space<vmem>>, vector<1x16x16xf32>
    %3 = vector.shape_cast %2 : vector<1x16x16xf32> to vector<16x16xf32>
    %cst = arith.constant dense<0.000000e+00> : vector<16x32xf32>
    %4 = tpu.matmul %3, %1, %cst {dimension_numbers = #tpu.dot_dimension_numbers<[1], [0], [0], [1], [0, 0, 1, 1], [], []>} : vector<16x16xf32>, vector<16x32xf32>, vector<16x32xf32> -> vector<16x32xf32>
    %cst_6 = arith.constant dense<0.000000e+00> : vector<32x32xf32>
    %5 = tpu.matmul %0, %4, %cst_6 {dimension_numbers = #tpu.dot_dimension_numbers<[1], [0], [0], [1], [0, 0, 1, 1], [], []>} : vector<32x16xf32>, vector<16x32xf32>, vector<32x32xf32> -> vector<32x32xf32>
    %c0_7 = arith.constant 0 : index
    %c0_8 = arith.constant 0 : index
    %c0_9 = arith.constant 0 : index
    %6 = vector.load %arg4[%c0_7, %c0_8, %c0_9] : memref<1x32x32xf32, #tpu.memory_space<vmem>>, vector<1x32x32xf32>
    %7 = vector.shape_cast %6 : vector<1x32x32xf32> to vector<32x32xf32>
    %8 = vector.shape_cast %5 : vector<32x32xf32> to vector<1x32x32xf32>
    tpu.vector_store %arg4[%c0_7, %c0_8, %c0_9], %8 {strides = array<i32>} : memref<1x32x32xf32, #tpu.memory_space<vmem>>, vector<1x32x32xf32>,
    return
  }
  func.func @transform_0(%arg0: i32) -> (i32, i32) {
    %c0_i32 = arith.constant 0 : i32
    %c0_i32_0 = arith.constant 0 : i32
    %c0_i32_1 = arith.constant 0 : i32
    return %c0_i32, %c0_i32_0 : i32, i32
  }
  func.func @transform_1(%arg0: i32) -> (i32, i32) {
    %c0_i32 = arith.constant 0 : i32
    %c0_i32_0 = arith.constant 0 : i32
    %c0_i32_1 = arith.constant 0 : i32
    return %c0_i32, %c0_i32_0 : i32, i32
  }
  func.func @transform_2(%arg0: i32) -> (i32, i32, i32) {
    %c0_i32 = arith.constant 0 : i32
    %c0_i32_0 = arith.constant 0 : i32
    %c0_i32_1 = arith.constant 0 : i32
    return %arg0, %c0_i32, %c0_i32_0 : i32, i32, i32
  }
  func.func @transform_3(%arg0: i32) -> (i32, i32, i32) {
    %c0_i32 = arith.constant 0 : i32
    %c0_i32_0 = arith.constant 0 : i32
    %c0_i32_1 = arith.constant 0 : i32
    return %arg0, %c0_i32, %c0_i32_0 : i32, i32, i32
  }
}

</mosaic_0001>

<llo_original>
// kernel: tpu_custom_call.1
$region0: #{tpu_custom_call.1}
  #allocation0 [shape = 'u32[]', space=smem, size = 0x4, offset = 0x4, fixed_abs, tag = 'smem constant byte address 0x4 - core index']
  #allocation1 [shape = 'u32[144,128]{1,0:T(1,128)}', space=vmem, size = 0x12000, scoped, tag = 'internal scratch']
  %s0 = inlined_call_operand.vmem [shape: f32[32,16], index: 0, kind: input, shape index: {}]
  %s1 = inlined_call_operand.vmem [shape: f32[16,32], index: 1, kind: input, shape index: {}]
  %s2 = inlined_call_operand.hbm [shape: f32[8,16,16], index: 2, kind: input, shape index: {}]
  %s3 = inlined_call_operand.hbm [shape: f32[8,32,32], index: 3, kind: output, shape index: {}]
  %s4 = sld [smem:[#allocation0]]
  $region49: #{tpu_custom_call.1} parent=0
    _
  %s6 = ssub.s32 1, %s4
  %s7 = scalar_select 0, %s6, %s4
  $region1: #{tpu_custom_call.1} parent=0
    #allocation2 [shape = 'u8[16384]{0}', space=vmem, size = 0x4000, scoped, tag = 'input window, operand 2']
    #allocation3 [shape = 's32[2]{0}', space=sflag, size = 0x8, scoped, tag = 'scoped memory for tpu_custom_call.1']
    #allocation4 [shape = 's32[2]{0}', space=sflag, size = 0x8, scoped, tag = 'scoped memory for tpu_custom_call.1']
    #allocation5 [shape = 'u8[32768]{0}', space=vmem, size = 0x8000, scoped, tag = 'output window, operand 0']
    %8 = vsyncpa [#allocation3], 0
    %s9 = scalar_lea.sflag [#allocation3], 1
    %10 = vsyncpa %s9, 0
    %11 = vsyncpa [#allocation4], 0
    %s12 = scalar_lea.sflag [#allocation4], 1
    %13 = vsyncpa %s12, 0
    loop: start=0, step=1, limit=10
    $region2: #{tpu_custom_call.1} parent=1 // loop_pre_header
      _
    $region3: #{tpu_custom_call.1} parent=1 // loop_header
      %s15 = sphi 0, %s19
      %p16 = scmp.ge.s32.totalorder %s15, 10
      %s23 = sphi 0, %s23
      %s25 = sphi 0, %s23
      %s26 = sphi 0, %s25
      %s40 = sphi 0, %s26
      %s44 = sphi 0, %s44
      %s46 = sphi 0, %s44
      %s47 = sphi 0, %s46
      %s61 = sphi 0, %s47
      %s67 = sphi 0, %s69
      %s70 = sphi 0, %s67
      %s71 = sphi 0, %s70
      %s87 = sphi 0, %s71
      %s93 = sphi 0, %s95
      %s96 = sphi 0, %s93
      %s97 = sphi 0, %s96
      %s113 = sphi 0, %s97
    $region4: #{tpu_custom_call.1} parent=1 // loop_header_branch
      %18 = sbr.rel (%p16) target = $region8
    $region5: #{tpu_custom_call.1} parent=1 // loop_body
      %s20 = ssub.s32 %s15, 1
      %s21 = ssub.s32 %s15, 2
      %s22 = sadd.s32 %s15, 1
      %s24 = sadd.s32 %s23, 1
      %p27 = scmp.eq.s32.totalorder %s15, 7
      %p28 = scmp.ne.s32.totalorder %s23, %s25
      %p29 = scmp.eq.s32.totalorder %s15, 0
      %p30 = por %p28, %p29
      %p31 = scmp.ne.s32.totalorder %s23, %s25
      %p32 = scmp.eq.s32.totalorder %s20, 7
      %p33 = por %p31, %p32
      %p34 = scmp.ne.s32.totalorder %s25, %s26
      %p35 = scmp.eq.s32.totalorder %s20, 0
      %p36 = por %p34, %p35
      %p37 = scmp.ne.s32.totalorder %s25, %s26
      %p38 = scmp.eq.s32.totalorder %s21, 7
      %p39 = por %p37, %p38
      %p41 = scmp.ne.s32.totalorder %s26, %s40
      %p42 = scmp.eq.s32.totalorder %s21, 0
      %p43 = por %p41, %p42
      %s45 = sadd.s32 %s44, 1
      %p48 = scmp.eq.s32.totalorder %s15, 7
      %p49 = scmp.ne.s32.totalorder %s44, %s46
      %p50 = scmp.eq.s32.totalorder %s15, 0
      %p51 = por %p49, %p50
      %p52 = scmp.ne.s32.totalorder %s44, %s46
      %p53 = scmp.eq.s32.totalorder %s20, 7
      %p54 = por %p52, %p53
      %p55 = scmp.ne.s32.totalorder %s46, %s47
      %p56 = scmp.eq.s32.totalorder %s20, 0
      %p57 = por %p55, %p56
      %p58 = scmp.ne.s32.totalorder %s46, %s47
      %p59 = scmp.eq.s32.totalorder %s21, 7
      %p60 = por %p58, %p59
      %p62 = scmp.ne.s32.totalorder %s47, %s61
      %p63 = scmp.eq.s32.totalorder %s21, 0
      %p64 = por %p62, %p63
      %s65 = ssub.s32 %s15, %s22
      %p66 = scmp.eq.s32.totalorder %s65, 0
      %s68 = sadd.s32 %s67, 1
      %s69 = scalar_select %p66, %s67, %s68
      %p72 = pneg %p66
      %p73 = scmp.eq.s32.totalorder %s15, 7
      %p74 = por %p72, %p73
      %p75 = scmp.ne.s32.totalorder %s67, %s70
      %p76 = scmp.eq.s32.totalorder %s15, 0
      %p77 = por %p75, %p76
      %p78 = scmp.ne.s32.totalorder %s67, %s70
      %p79 = scmp.eq.s32.totalorder %s20, 7
      %p80 = por %p78, %p79
      %p81 = scmp.ne.s32.totalorder %s70, %s71
      %p82 = scmp.eq.s32.totalorder %s20, 0
      %p83 = por %p81, %p82
      %p84 = scmp.ne.s32.totalorder %s70, %s71
      %p85 = scmp.eq.s32.totalorder %s21, 7
      %p86 = por %p84, %p85
      %p88 = scmp.ne.s32.totalorder %s71, %s87
      %p89 = scmp.eq.s32.totalorder %s21, 0
      %p90 = por %p88, %p89
      %s91 = ssub.s32 %s15, %s22
      %p92 = scmp.eq.s32.totalorder %s91, 0
      %s94 = sadd.s32 %s93, 1
      %s95 = scalar_select %p92, %s93, %s94
      %p98 = pneg %p92
      %p99 = scmp.eq.s32.totalorder %s15, 7
      %p100 = por %p98, %p99
      %p101 = scmp.ne.s32.totalorder %s93, %s96
      %p102 = scmp.eq.s32.totalorder %s15, 0
      %p103 = por %p101, %p102
      %p104 = scmp.ne.s32.totalorder %s93, %s96
      %p105 = scmp.eq.s32.totalorder %s20, 7
      %p106 = por %p104, %p105
      %p107 = scmp.ne.s32.totalorder %s96, %s97
      %p108 = scmp.eq.s32.totalorder %s20, 0
      %p109 = por %p107, %p108
      %p110 = scmp.ne.s32.totalorder %s96, %s97
      %p111 = scmp.eq.s32.totalorder %s21, 7
      %p112 = por %p110, %p111
      %p114 = scmp.ne.s32.totalorder %s97, %s113
      %p115 = scmp.eq.s32.totalorder %s21, 0
      %p116 = por %p114, %p115
      %p117 = scmp.le.s32.totalorder 1, %s15
      %p118 = scmp.lt.s32.totalorder %s15, 9
      %p119 = pnand %p117, %p118
      %p120 = pneg %p119
      // Predicated region
      $region9: #{tpu_custom_call.1} parent=5 // pred_check
        _
      $region10: #{tpu_custom_call.1} parent=5 // pred_check_branch
        %122 = sbr.rel (%p119) target = $region12
      $region11: #{tpu_custom_call.1} parent=5 // pred_region
        %s123 = ssub.s32 %s15, 1
        // Predicated region
        $region13: #{tpu_custom_call.1} parent=11 // pred_check
          %p124 = pneg %p36
        $region14: #{tpu_custom_call.1} parent=11 // pred_check_branch
          %126 = sbr.rel (%p124) target = $region16
        $region15: #{tpu_custom_call.1} parent=11 // pred_region
          _
        $region16: #{tpu_custom_call.1} parent=11 // pred_fallthru
          _
        // Predicated region
        $region17: #{tpu_custom_call.1} parent=11 // pred_check
          %p127 = pneg %p57
        $region18: #{tpu_custom_call.1} parent=11 // pred_check_branch
          %129 = sbr.rel (%p127) target = $region20
        $region19: #{tpu_custom_call.1} parent=11 // pred_region
          _
        $region20: #{tpu_custom_call.1} parent=11 // pred_fallthru
          _
      $region12: #{tpu_custom_call.1} parent=5 // pred_fallthru
        _
      %p130 = scmp.lt.s32.totalorder %s15, 8
      // Predicated region
      $region21: #{tpu_custom_call.1} parent=5 // pred_check
        %p131 = pneg %p130
      $region22: #{tpu_custom_call.1} parent=5 // pred_check_branch
        %133 = sbr.rel (%p131) target = $region24
      $region23: #{tpu_custom_call.1} parent=5 // pred_region
        // Predicated region
        $region25: #{tpu_custom_call.1} parent=23 // pred_check
          %p134 = pneg %p77
        $region26: #{tpu_custom_call.1} parent=23 // pred_check_branch
          %136 = sbr.rel (%p134) target = $region28
        $region27: #{tpu_custom_call.1} parent=23 // pred_region
          %s137 = sand.u32 %s67, 1
          %s138 = scalar_lea.sflag [#allocation3], %s137
          %s139 = sand.u32 %s67, 1
          %s140 = smul.addr %s139, 16
          %s141 = scalar_lea.vmem [#allocation2], %s140
          %s143 = ssub.s32 256, 256
          %144 = vsyncadd %s138, %s143
          %s145 = smul.addr %s15, 2
          %s146 = smul.addr %s145, 128
          %s147 = scalar_lea.hbm %s2, %s146
          %s148 = sshll.u32 %s141, 4
          %s149 = int_to_ptr.vmem [resolvable:$true] %s148
          %154 = dma.hbm_to_vmem [thread:$0]  %s147, 256, %s149, %s138, 128, 128, 8
        $region28: #{tpu_custom_call.1} parent=23 // pred_fallthru
          _
      $region24: #{tpu_custom_call.1} parent=5 // pred_fallthru
        _
      %p155 = scmp.le.s32.totalorder 1, %s15
      %p156 = scmp.lt.s32.totalorder %s15, 9
      %p157 = pnand %p155, %p156
      %p158 = pneg %p157
      // Predicated region
      $region29: #{tpu_custom_call.1} parent=5 // pred_check
        _
      $region30: #{tpu_custom_call.1} parent=5 // pred_check_branch
        %160 = sbr.rel (%p157) target = $region32
      $region31: #{tpu_custom_call.1} parent=5 // pred_region
        %s161 = ssub.s32 %s15, 1
        %s162 = sand.u32 %s70, 1
        %s163 = scalar_lea.sflag [#allocation3], %s162
        %s164 = sand.u32 %s70, 1
        %s165 = smul.addr %s164, 16
        %s166 = scalar_lea.vmem [#allocation2], %s165
        // Predicated region
        $region33: #{tpu_custom_call.1} parent=31 // pred_check
          %p167 = pneg %p83
        $region34: #{tpu_custom_call.1} parent=31 // pred_check_branch
          %169 = sbr.rel (%p167) target = $region36
        $region35: #{tpu_custom_call.1} parent=31 // pred_region
          %170 = dma.done %s163, 256
        $region36: #{tpu_custom_call.1} parent=31 // pred_fallthru
          _
        %p171 = pneg %p36
        %p172 = pneg %p33
        %p173 = pneg %p57
        %p174 = pneg %p54
        %s175 = sand.u32 %s70, 1
        %s176 = scalar_lea.sflag [#allocation3], %s175
        %s177 = sand.u32 %s70, 1
        %s178 = smul.addr %s177, 16
        %s179 = scalar_lea.vmem [#allocation2], %s178
        %p180 = pneg %p83
        %p181 = pneg %p80
        %p182 = pneg %p109
        %p183 = pneg %p106
        %s184 = sand.u32 %s96, 1
        %s185 = scalar_lea.sflag [#allocation4], %s184
        %s186 = sand.u32 %s96, 1
        %s187 = smul.addr %s186, 32
        %s188 = scalar_lea.vmem [#allocation5], %s187
        %v189 = vld [vmem:[%s0] sm:$0xff]
        %v190 = vld [vmem:[%s0 + $0x8] sm:$0xff]
        %v191 = vld [vmem:[%s0 + $0x10] sm:$0xff]
        %v192 = vld [vmem:[%s0 + $0x18] sm:$0xff]
        %v193 = vld [vmem:[%s1] sm:$0xff]
        %v194 = vld [vmem:[%s1 + $0x8] sm:$0xff]
        %v195 = vld [vmem:[%s166] sm:$0xff]
        %v196 = vld [vmem:[%s166 + $0x8] sm:$0xff]
        %vm197 = vcmask 130048
        %v199 = vsel %vm197, %v195, 0
        %v202 = vsel %vm197, %v196, 0
        %204 = vmatprep.subr.mxu0 0.0
        %205 = vmatpush1.msra.mxu0 0.0
        %206 = vmatprep.subr.mxu0 0.0
        %207 = vmatpush1.msra.mxu0 0.0
        %208 = vmatprep.subr.mxu0 0.0
        %209 = vmatpush1.msra.mxu0 0.0
        %210 = vmatprep.subr.mxu0 0.0
        %211 = vmatpush1.msra.mxu0 0.0
        %212 = vmatprep.subr.mxu0 0.0
        %213 = vmatpush1.msra.mxu0 0.0
        %214 = vmatprep.subr.mxu0 0.0
        %215 = vmatpush1.msra.mxu0 0.0
        %216 = vmatprep.subr.mxu0 0.0
        %217 = vmatpush1.msra.mxu0 0.0
        %218 = vmatprep.subr.mxu0 0.0
        %219 = vmatpush1.msra.mxu0 0.0
        %220 = vmatprep.subr.mxu0 0.0
        %221 = vmatpush1.msra.mxu0 0.0
        %222 = vmatprep.subr.mxu0 0.0
        %223 = vmatpush1.msra.mxu0 0.0
        %224 = vmatprep.subr.mxu0 0.0
        %225 = vmatpush1.msra.mxu0 0.0
        %226 = vmatprep.subr.mxu0 0.0
        %227 = vmatpush1.msra.mxu0 0.0
        %228 = vmatprep.subr.mxu0 0.0
        %229 = vmatpush1.msra.mxu0 0.0
        %230 = vmatprep.subr.mxu0 0.0
        %231 = vmatpush1.msra.mxu0 0.0
        %232 = vmatprep.subr.mxu0 0.0
        %233 = vmatpush1.msra.mxu0 %v194
        %234 = vmatprep.subr.mxu0 0.0
        %235 = vmatpush1.msra.mxu0 %v193
        %236 = vmatprep.subr.mxu0 0.0
        %237 = vmatpush2.msra.mxu0 0.0
        %238 = vmatprep.subr.mxu0 0.0
        %239 = vmatpush2.msra.mxu0 0.0
        %240 = vmatprep.subr.mxu0 0.0
        %241 = vmatpush2.msra.mxu0 0.0
        %242 = vmatprep.subr.mxu0 0.0
        %243 = vmatpush2.msra.mxu0 0.0
        %244 = vmatprep.subr.mxu0 0.0
        %245 = vmatpush2.msra.mxu0 0.0
        %246 = vmatprep.subr.mxu0 0.0
        %247 = vmatpush2.msra.mxu0 0.0
        %248 = vmatprep.subr.mxu0 0.0
        %249 = vmatpush2.msra.mxu0 0.0
        %250 = vmatprep.subr.mxu0 0.0
        %251 = vmatpush2.msra.mxu0 0.0
        %252 = vmatprep.subr.mxu0 0.0
        %253 = vmatpush2.msra.mxu0 0.0
        %254 = vmatprep.subr.mxu0 0.0
        %255 = vmatpush2.msra.mxu0 0.0
        %256 = vmatprep.subr.mxu0 0.0
        %257 = vmatpush2.msra.mxu0 0.0
        %258 = vmatprep.subr.mxu0 0.0
        %259 = vmatpush2.msra.mxu0 0.0
        %260 = vmatprep.subr.mxu0 0.0
        %261 = vmatpush2.msra.mxu0 0.0
        %262 = vmatprep.subr.mxu0 0.0
        %263 = vmatpush2.msra.mxu0 0.0
        %264 = vmatprep.subr.mxu0 0.0
        %265 = vmatpush2.msra.mxu0 0.0
        %266 = vmatprep.subr.mxu0 0.0
        %267 = vmatpush2.msra.mxu0 0.0
        %268 = vmatprep.mubr.f32.mxu0 0.0
        %269 = vmatmul.mubr.f32.gmra.mxu0 %v199
        %v270 = vpop.f32.mrf.mxu0
        %v271 = vadd.f32 0.0, %v270
        %v272 = vpop.f32.mrf.mxu0
        %273 = vmatprep.mubr.f32.mxu0 0.0
        %274 = vmatmul.mubr.f32.gmra.mxu0 %v202
        %v275 = vpop.f32.mrf.mxu0
        %v276 = vadd.f32 0.0, %v275
        %v277 = vpop.f32.mrf.mxu0
        %278 = vdwg.mxu0
        %v280 = vsel %vm197, %v189, 0
        %v283 = vsel %vm197, %v190, 0
        %v286 = vsel %vm197, %v191, 0
        %v289 = vsel %vm197, %v192, 0
        %291 = vmatprep.subr.mxu0 0.0
        %292 = vmatpush1.msra.mxu0 0.0
        %293 = vmatprep.subr.mxu0 0.0
        %294 = vmatpush1.msra.mxu0 0.0
        %295 = vmatprep.subr.mxu0 0.0
        %296 = vmatpush1.msra.mxu0 0.0
        %297 = vmatprep.subr.mxu0 0.0
        %298 = vmatpush1.msra.mxu0 0.0
        %299 = vmatprep.subr.mxu0 0.0
        %300 = vmatpush1.msra.mxu0 0.0
        %301 = vmatprep.subr.mxu0 0.0
        %302 = vmatpush1.msra.mxu0 0.0
        %303 = vmatprep.subr.mxu0 0.0
        %304 = vmatpush1.msra.mxu0 0.0
        %305 = vmatprep.subr.mxu0 0.0
        %306 = vmatpush1.msra.mxu0 0.0
        %307 = vmatprep.subr.mxu0 0.0
        %308 = vmatpush1.msra.mxu0 0.0
        %309 = vmatprep.subr.mxu0 0.0
        %310 = vmatpush1.msra.mxu0 0.0
        %311 = vmatprep.subr.mxu0 0.0
        %312 = vmatpush1.msra.mxu0 0.0
        %313 = vmatprep.subr.mxu0 0.0
        %314 = vmatpush1.msra.mxu0 0.0
        %315 = vmatprep.subr.mxu0 0.0
        %316 = vmatpush1.msra.mxu0 0.0
        %317 = vmatprep.subr.mxu0 0.0
        %318 = vmatpush1.msra.mxu0 0.0
        %319 = vmatprep.subr.mxu0 0.0
        %320 = vmatpush1.msra.mxu0 %v276
        %321 = vmatprep.subr.mxu0 0.0
        %322 = vmatpush1.msra.mxu0 %v271
        %323 = vmatprep.subr.mxu0 0.0
        %324 = vmatpush2.msra.mxu0 0.0
        %325 = vmatprep.subr.mxu0 0.0
        %326 = vmatpush2.msra.mxu0 0.0
        %327 = vmatprep.subr.mxu0 0.0
        %328 = vmatpush2.msra.mxu0 0.0
        %329 = vmatprep.subr.mxu0 0.0
        %330 = vmatpush2.msra.mxu0 0.0
        %331 = vmatprep.subr.mxu0 0.0
        %332 = vmatpush2.msra.mxu0 0.0
        %333 = vmatprep.subr.mxu0 0.0
        %334 = vmatpush2.msra.mxu0 0.0
        %335 = vmatprep.subr.mxu0 0.0
        %336 = vmatpush2.msra.mxu0 0.0
        %337 = vmatprep.subr.mxu0 0.0
        %338 = vmatpush2.msra.mxu0 0.0
        %339 = vmatprep.subr.mxu0 0.0
        %340 = vmatpush2.msra.mxu0 0.0
        %341 = vmatprep.subr.mxu0 0.0
        %342 = vmatpush2.msra.mxu0 0.0
        %343 = vmatprep.subr.mxu0 0.0
        %344 = vmatpush2.msra.mxu0 0.0
        %345 = vmatprep.subr.mxu0 0.0
        %346 = vmatpush2.msra.mxu0 0.0
        %347 = vmatprep.subr.mxu0 0.0
        %348 = vmatpush2.msra.mxu0 0.0
        %349 = vmatprep.subr.mxu0 0.0
        %350 = vmatpush2.msra.mxu0 0.0
        %351 = vmatprep.subr.mxu0 0.0
        %352 = vmatpush2.msra.mxu0 0.0
        %353 = vmatprep.subr.mxu0 0.0
        %354 = vmatpush2.msra.mxu0 0.0
        %355 = vmatprep.mubr.f32.mxu0 0.0
        %356 = vmatmul.mubr.f32.gmra.mxu0 %v280
        %v357 = vpop.f32.mrf.mxu0
        %v358 = vadd.f32 0.0, %v357
        %v359 = vpop.f32.mrf.mxu0
        %360 = vmatprep.mubr.f32.mxu0 0.0
        %361 = vmatmul.mubr.f32.gmra.mxu0 %v283
        %v362 = vpop.f32.mrf.mxu0
        %v363 = vadd.f32 0.0, %v362
        %v364 = vpop.f32.mrf.mxu0
        %365 = vmatprep.mubr.f32.mxu0 0.0
        %366 = vmatmul.mubr.f32.gmra.mxu0 %v286
        %v367 = vpop.f32.mrf.mxu0
        %v368 = vadd.f32 0.0, %v367
        %v369 = vpop.f32.mrf.mxu0
        %370 = vmatprep.mubr.f32.mxu0 0.0
        %371 = vmatmul.mubr.f32.gmra.mxu0 %v289
        %v372 = vpop.f32.mrf.mxu0
        %v373 = vadd.f32 0.0, %v372
        %v374 = vpop.f32.mrf.mxu0
        %375 = vdwg.mxu0
        %vm376 = vcmask 261120
        %377 = vst.msk [vmem:[%s188] sm:$0xff] %vm376, %v358
        %378 = vst.msk [vmem:[%s188 + $0x8] sm:$0xff] %vm376, %v363
        %379 = vst.msk [vmem:[%s188 + $0x10] sm:$0xff] %vm376, %v368
        %380 = vst.msk [vmem:[%s188 + $0x18] sm:$0xff] %vm376, %v373
        %s381 = sand.u32 %s96, 1
        %s382 = scalar_lea.sflag [#allocation4], %s381
        %s383 = sand.u32 %s96, 1
        %s384 = smul.addr %s383, 32
        %s385 = scalar_lea.vmem [#allocation5], %s384
        // Predicated region
        $region37: #{tpu_custom_call.1} parent=31 // pred_check
          %p386 = pneg %p106
        $region38: #{tpu_custom_call.1} parent=31 // pred_check_branch
          %388 = sbr.rel (%p386) target = $region40
        $region39: #{tpu_custom_call.1} parent=31 // pred_region
          %s390 = ssub.s32 512, 512
          %391 = vsyncadd %s382, %s390
          %s392 = smul.addr %s20, 4
          %s393 = smul.addr %s392, 128
          %s394 = scalar_lea.hbm %s3, %s393
          %s395 = sshll.u32 %s385, 4
          %s396 = int_to_ptr.vmem [resolvable:$true] %s395
          %401 = dma.vmem_to_hbm [thread:$0]  %s396, 512, %s394, %s382, 128, 128, 8
        $region40: #{tpu_custom_call.1} parent=31 // pred_fallthru
          _
      $region32: #{tpu_custom_call.1} parent=5 // pred_fallthru
        _
      %p402 = scmp.le.s32.totalorder 2, %s15
      // Predicated region
      $region41: #{tpu_custom_call.1} parent=5 // pred_check
        %p403 = pneg %p402
      $region42: #{tpu_custom_call.1} parent=5 // pred_check_branch
        %405 = sbr.rel (%p403) target = $region44
      $region43: #{tpu_custom_call.1} parent=5 // pred_region
        %s406 = ssub.s32 %s15, 2
        // Predicated region
        $region45: #{tpu_custom_call.1} parent=43 // pred_check
          %p407 = pneg %p112
        $region46: #{tpu_custom_call.1} parent=43 // pred_check_branch
          %409 = sbr.rel (%p407) target = $region48
        $region47: #{tpu_custom_call.1} parent=43 // pred_region
          %s410 = sand.u32 %s97, 1
          %s411 = scalar_lea.sflag [#allocation4], %s410
          %s412 = sand.u32 %s97, 1
          %s413 = smul.addr %s412, 32
          %s414 = scalar_lea.vmem [#allocation5], %s413
          %415 = dma.done %s411, 512
        $region48: #{tpu_custom_call.1} parent=43 // pred_fallthru
          _
      $region44: #{tpu_custom_call.1} parent=5 // pred_fallthru
        _
    $region6: #{tpu_custom_call.1} parent=1 // loop_footer
      %s19 = sadd.s32 1, %s15
    $region7: #{tpu_custom_call.1} parent=1 // loop_footer_branch
      %14 = sbr.rel target = $region3
    $region8: #{tpu_custom_call.1} parent=1 // loop_exit
      _
    %416 = vsyncpa [#allocation3], 1
    %s417 = scalar_lea.sflag [#allocation3], 1
    %418 = vsyncpa %s417, 1
    %419 = vsyncpa [#allocation4], 1
    %s420 = scalar_lea.sflag [#allocation4], 1
    %421 = vsyncpa %s420, 1

</llo_original>
